<compile_context>
chip_gen: v5e
topology: v5e:2x2
jax: 0.10.0
libtpu: 0.0.40
codegen_flags: <defaults>
</compile_context>

<pallas_src>
import jax
import jax.numpy as jnp
from jax.experimental import pallas as pl
from jax.experimental.pallas import tpu as pltpu


# ---------------------------------------------------------------------------
# Kernel
# ---------------------------------------------------------------------------
def _linear_kernel(x_ref, w_ref, b_ref, o_ref, acc_ref):
    # x_ref:   (tm, tk)  activation tile (compute dtype)
    # w_ref:   (tk, tn)  weight tile, already transposed to (K, N) layout
    # b_ref:   (1, tn)   bias tile (f32)
    # o_ref:   (tm, tn)  output tile
    # acc_ref: (tm, tn)  f32 accumulator, resident across the K grid axis
    k = pl.program_id(2)

    partial = jnp.dot(x_ref[...], w_ref[...],
                      preferred_element_type=jnp.float32)

    @pl.when(k == 0)
    def _():
        acc_ref[...] = partial          # skip zero-init + '+=' on first step

    @pl.when(k > 0)
    def _():
        acc_ref[...] += partial

    @pl.when(k == pl.num_programs(2) - 1)
    def _():
        o_ref[...] = (acc_ref[...] + b_ref[...]).astype(o_ref.dtype)


# ---------------------------------------------------------------------------
# Helpers
# ---------------------------------------------------------------------------
def _round_up(x, m):
    return ((x + m - 1) // m) * m


def _pad_to(a, target_shape):
    pads = [(0, t - s) for s, t in zip(a.shape, target_shape)]
    if any(p[1] for p in pads):
        return jnp.pad(a, pads)
    return a


def _device_kind():
    try:
        return jax.devices()[0].device_kind.lower()
    except Exception:
        return ""


def _default_tiles_and_cap(kind):
    """Per-generation default (tm, tn, tk) and a safe scoped-VMEM cap."""
    if "v5" in kind:
        # v5e: 16 GiB HBM, ~240 flops/byte roofline, 128 MiB VMEM.
        return (512, 512, 512), (96 << 20)
    if "v6" in kind:
        # v6e: 2x256 MXU, ~675 flops/byte roofline, 128 MiB VMEM -> go big.
        return (1024, 1024, 512), (96 << 20)
    # v7x (or unknown -> be conservative): 64 MiB VMEM, ~310 flops/byte.
    return (512, 512, 512), (56 << 20)


def _vmem_need(tm, tn, tk, itemsize_c, itemsize_o):
    # double-buffered inputs + f32 accumulator + double-buffered output
    return (2 * tm * tk * itemsize_c        # x tiles
            + 2 * tk * tn * itemsize_c      # w tiles
            + 2 * tn * 4                    # bias tiles (f32)
            + tm * tn * 4                   # accumulator scratch
            + 2 * tm * tn * itemsize_o)     # output tiles


# ---------------------------------------------------------------------------
# Wrapper
# ---------------------------------------------------------------------------
def mlp_forward(x, weight, bias, *, tm=None, tn=None, tk=None,
                compute_dtype=None, use_pallas=None,
                vmem_limit_bytes=None, interpret=False):
    """y = x @ weight.T + bias, matching torch.nn.Linear.

    x:      (..., input_dim)
    weight: (output_dim, input_dim)   -- PyTorch Linear layout
    bias:   (output_dim,)

    compute_dtype: MXU operand dtype.  Defaults to bfloat16 when x is float32
                   (f32 accumulation is always kept) -- this is a deliberate,
                   documented numerics change; pass jnp.float32 to opt out.
    """
    *lead, in_dim = x.shape
    out_dim, w_in = weight.shape
    assert w_in == in_dim, (w_in, in_dim)

    M = 1
    for d in lead:
        M *= d

    # --- tiny-problem fallback: pallas_call + grid-step overhead loses to XLA.
    if use_pallas is None:
        big_enough = (2 * M * in_dim * out_dim) >= (64 << 20)   # >= 64 MFLOPs
        tiled_enough = min(M, in_dim, out_dim) >= 128
        use_pallas = big_enough and tiled_enough
    if not use_pallas:
        y = jnp.dot(x.reshape(M, in_dim), weight.T) + bias
        return y.reshape(*lead, out_dim).astype(x.dtype)

    out_dtype = x.dtype
    if compute_dtype is not None:
        cdt = compute_dtype
    elif jnp.dtype(x.dtype) == jnp.dtype(jnp.float32):
        cdt = jnp.bfloat16          # full-rate MXU + half the x/W HBM traffic
    else:
        cdt = x.dtype
    itemsize_c = jnp.dtype(cdt).itemsize
    itemsize_o = jnp.dtype(out_dtype).itemsize

    kind = _device_kind()
    (dtm, dtn, dtk), vmem_cap = _default_tiles_and_cap(kind)
    tm = dtm if tm is None else tm
    tn = dtn if tn is None else tn
    tk = dtk if tk is None else tk

    # --- clamp tiles to the (128-rounded) problem so we never over-pad.
    tm = min(tm, _round_up(M, 128))
    tk = min(tk, _round_up(in_dim, 128))
    np128 = _round_up(out_dim, 128)
    if np128 <= 2048:
        # Collapse the j axis: x is read from HBM exactly once.
        tn = np128
    else:
        tn = min(tn, np128)

    # --- shrink tiles until the double-buffered footprint fits scoped VMEM.
    while _vmem_need(tm, tn, tk, itemsize_c, itemsize_o) + (2 << 20) > vmem_cap:
        if tm >= tn and tm >= tk and tm > 128:
            tm = _round_up(tm // 2, 128)
        elif tk >= tn and tk > 128:
            tk = _round_up(tk // 2, 128)
        elif tn > 128:
            tn = _round_up(tn // 2, 128)
        else:
            break

    # --- v7x has 2 TensorCores: keep >= 2 parallel (i, j) blocks if possible.
    if "v7" in kind:
        parallel_blocks = pl.cdiv(M, tm) * pl.cdiv(out_dim, tn)
        if parallel_blocks < 2 and tm >= 256:
            tm = _round_up(tm // 2, 128)

    Mp = _round_up(M, tm)
    Kp = _round_up(in_dim, tk)
    Np = _round_up(out_dim, tn)

    # --- pad (no-op when already aligned) and cast.
    # Weight is transposed ONCE here to (K, N) so the kernel is a plain
    # row-major matmul (no per-tile transposed-RHS / XLU work).
    x2 = _pad_to(x.reshape(M, in_dim).astype(cdt), (Mp, Kp))
    w2 = _pad_to(weight.T.astype(cdt), (Kp, Np))
    b2 = _pad_to(bias.astype(jnp.float32).reshape(1, out_dim), (1, Np))

    grid = (Mp // tm, Np // tn, Kp // tk)   # reduction axis last

    if vmem_limit_bytes is None:
        need = _vmem_need(tm, tn, tk, itemsize_c, itemsize_o)
        vmem_limit_bytes = min(int(need * 1.5) + (2 << 20), vmem_cap)

    flops = 2 * Mp * Kp * Np
    bytes_accessed = (x2.size * x2.dtype.itemsize
                      + w2.size * w2.dtype.itemsize
                      + b2.size * b2.dtype.itemsize
                      + Mp * Np * itemsize_o)

    out = pl.pallas_call(
        _linear_kernel,
        out_shape=jax.ShapeDtypeStruct((Mp, Np), out_dtype),
        grid_spec=pltpu.PrefetchScalarGridSpec(
            num_scalar_prefetch=0,
            grid=grid,
            in_specs=[
                pl.BlockSpec((tm, tk), lambda i, j, k: (i, k)),   # activations
                pl.BlockSpec((tk, tn), lambda i, j, k: (k, j)),   # weight (K,N)
                pl.BlockSpec((1, tn), lambda i, j, k: (0, j)),    # bias
            ],
            out_specs=pl.BlockSpec((tm, tn), lambda i, j, k: (i, j)),
            scratch_shapes=[pltpu.VMEM((tm, tn), jnp.float32)],
        ),
        compiler_params=pltpu.CompilerParams(
            dimension_semantics=("parallel", "parallel", "arbitrary"),
            vmem_limit_bytes=vmem_limit_bytes,
        ),
        cost_estimate=pl.CostEstimate(
            flops=flops, transcendentals=0, bytes_accessed=bytes_accessed),
        interpret=interpret,
    )(x2, w2, b2)

    return out[:M, :out_dim].reshape(*lead, out_dim)


# ---------------------------------------------------------------------------
# Self-test
# ---------------------------------------------------------------------------
if __name__ == "__main__":
    key = jax.random.PRNGKey(0)
    k_x, k_w, k_b = jax.random.split(key, 3)

    batch, seq, input_dim, output_dim = 2, 8, 32, 16

    # Deterministic parameter init (mimics nn.Linear uniform(-1/sqrt(in), 1/sqrt(in)))
    bound = 1.0 / (input_dim ** 0.5)
    weight = jax.random.uniform(k_w, (output_dim, input_dim),
                                minval=-bound, maxval=bound, dtype=jnp.float32)
    bias = jax.random.uniform(k_b, (output_dim,),
                              minval=-bound, maxval=bound, dtype=jnp.float32)

    x = jax.random.normal(k_x, (batch, seq, input_dim), dtype=jnp.float32)

    y_ref = x @ weight.T + bias

    # 1) Pallas path, f32 MXU operands (forced, since these shapes are tiny).
    y_f32 = mlp_forward(x, weight, bias, use_pallas=True,
                        compute_dtype=jnp.float32)
    y_f32 = jax.block_until_ready(y_f32)
    assert y_f32.shape == (batch, seq, output_dim)
    assert jnp.allclose(y_f32, y_ref, atol=1e-5, rtol=1e-5), \
        "f32 Pallas path mismatch"

    # 2) Default Pallas path: bf16 MXU operands, f32 accumulation -> looser tol.
    y_def = mlp_forward(x, weight, bias, use_pallas=True)
    y_def = jax.block_until_ready(y_def)
    assert jnp.allclose(y_def.astype(jnp.float32), y_ref,
                        atol=5e-2, rtol=5e-2), "bf16-default Pallas path mismatch"

    # 3) Auto-dispatch path (tiny problem -> plain XLA fallback, exact).
    y_auto = jax.block_until_ready(mlp_forward(x, weight, bias))
    assert jnp.allclose(y_auto, y_ref, atol=1e-5, rtol=1e-5), "fallback mismatch"

    print("KERNEL_OK")
</pallas_src>

<mosaic_0001>
module attributes {stable_mosaic.version = 11 : i64} {
  func.func @_linear_kernel(%arg0: i32, %arg1: i32, %arg2: i32, %arg3: memref<128x128xf32, #tpu.memory_space<vmem>>, %arg4: memref<128x128xf32, #tpu.memory_space<vmem>>, %arg5: memref<1x128xf32, #tpu.memory_space<vmem>>, %arg6: memref<128x128xf32, #tpu.memory_space<vmem>>, %arg7: memref<128x128xf32, #tpu.memory_space<vmem>>) attributes {dimension_semantics = [#tpu.dimension_semantics<parallel>, #tpu.dimension_semantics<parallel>, #tpu.dimension_semantics<arbitrary>], iteration_bounds = array<i64: 1, 1, 1>, scalar_prefetch = 0 : i64, scratch_operands = 1 : i64, tpu.core_type = #tpu.core_type<tc>, window_params = [{transform_indices = @transform_0, window_bounds = array<i64: 128, 128>}, {transform_indices = @transform_1, window_bounds = array<i64: 128, 128>}, {transform_indices = @transform_2, window_bounds = array<i64: 1, 128>}, {transform_indices = @transform_3, window_bounds = array<i64: 128, 128>}]} {
    %c0 = arith.constant 0 : index
    %c0_0 = arith.constant 0 : index
    %0 = vector.load %arg3[%c0, %c0_0] : memref<128x128xf32, #tpu.memory_space<vmem>>, vector<128x128xf32>
    %c0_1 = arith.constant 0 : index
    %c0_2 = arith.constant 0 : index
    %1 = vector.load %arg4[%c0_1, %c0_2] : memref<128x128xf32, #tpu.memory_space<vmem>>, vector<128x128xf32>
    %cst = arith.constant dense<0.000000e+00> : vector<128x128xf32>
    %2 = tpu.matmul %0, %1, %cst {dimension_numbers = #tpu.dot_dimension_numbers<[1], [0], [0], [1], [0, 0, 1, 1], [], []>} : vector<128x128xf32>, vector<128x128xf32>, vector<128x128xf32> -> vector<128x128xf32>
    %c0_i32 = arith.constant 0 : i32
    %3 = arith.cmpi eq, %arg2, %c0_i32 : i32
    %4 = arith.extui %3 : i1 to i32
    %c0_i32_3 = arith.constant 0 : i32
    %5 = arith.cmpi ne, %4, %c0_i32_3 : i32
    scf.if %5 {
      %c0_8 = arith.constant 0 : index
      %c0_9 = arith.constant 0 : index
      %12 = vector.load %arg7[%c0_8, %c0_9] : memref<128x128xf32, #tpu.memory_space<vmem>>, vector<128x128xf32>
      tpu.vector_store %arg7[%c0_8, %c0_9], %2 {strides = array<i32>} : memref<128x128xf32, #tpu.memory_space<vmem>>, vector<128x128xf32>,
    } else {
    }
    %c0_i32_4 = arith.constant 0 : i32
    %6 = arith.cmpi sgt, %arg2, %c0_i32_4 : i32
    %7 = arith.extui %6 : i1 to i32
    %c0_i32_5 = arith.constant 0 : i32
    %8 = arith.cmpi ne, %7, %c0_i32_5 : i32
    scf.if %8 {
      %c0_8 = arith.constant 0 : index
      %c0_9 = arith.constant 0 : index
      %12 = vector.load %arg7[%c0_8, %c0_9] : memref<128x128xf32, #tpu.memory_space<vmem>>, vector<128x128xf32>
      %13 = arith.addf %12, %2 : vector<128x128xf32>
      %c0_10 = arith.constant 0 : index
      %c0_11 = arith.constant 0 : index
      %14 = vector.load %arg7[%c0_10, %c0_11] : memref<128x128xf32, #tpu.memory_space<vmem>>, vector<128x128xf32>
      tpu.vector_store %arg7[%c0_10, %c0_11], %13 {strides = array<i32>} : memref<128x128xf32, #tpu.memory_space<vmem>>, vector<128x128xf32>,
    } else {
    }
    %c0_i32_6 = arith.constant 0 : i32
    %9 = arith.cmpi eq, %arg2, %c0_i32_6 : i32
    %10 = arith.extui %9 : i1 to i32
    %c0_i32_7 = arith.constant 0 : i32
    %11 = arith.cmpi ne, %10, %c0_i32_7 : i32
    scf.if %11 {
      %c0_8 = arith.constant 0 : index
      %c0_9 = arith.constant 0 : index
      %12 = vector.load %arg7[%c0_8, %c0_9] : memref<128x128xf32, #tpu.memory_space<vmem>>, vector<128x128xf32>
      %c0_10 = arith.constant 0 : index
      %c0_11 = arith.constant 0 : index
      %13 = vector.load %arg5[%c0_10, %c0_11] : memref<1x128xf32, #tpu.memory_space<vmem>>, vector<1x128xf32>
      %14 = vector.broadcast %13 : vector<1x128xf32> to vector<128x128xf32>
      %15 = arith.addf %12, %14 : vector<128x128xf32>
      %c0_12 = arith.constant 0 : index
      %c0_13 = arith.constant 0 : index
      %16 = vector.load %arg6[%c0_12, %c0_13] : memref<128x128xf32, #tpu.memory_space<vmem>>, vector<128x128xf32>
      tpu.vector_store %arg6[%c0_12, %c0_13], %15 {strides = array<i32>} : memref<128x128xf32, #tpu.memory_space<vmem>>, vector<128x128xf32>,
    } else {
    }
    return
  }
  func.func @transform_0(%arg0: i32, %arg1: i32, %arg2: i32) -> (i32, i32) {
    %c0_i32 = arith.constant 0 : i32
    return %arg0, %arg2 : i32, i32
  }
  func.func @transform_1(%arg0: i32, %arg1: i32, %arg2: i32) -> (i32, i32) {
    %c0_i32 = arith.constant 0 : i32
    return %arg2, %arg1 : i32, i32
  }
  func.func @transform_2(%arg0: i32, %arg1: i32, %arg2: i32) -> (i32, i32) {
    %c0_i32 = arith.constant 0 : i32
    %c0_i32_0 = arith.constant 0 : i32
    return %c0_i32, %arg1 : i32, i32
  }
  func.func @transform_3(%arg0: i32, %arg1: i32, %arg2: i32) -> (i32, i32) {
    %c0_i32 = arith.constant 0 : i32
    return %arg0, %arg1 : i32, i32
  }
}

</mosaic_0001>

<llo_original>
// kernel: tpu_custom_call.1
$region0: #{tpu_custom_call.1}
  #allocation0 [shape = 'u32[]', space=smem, size = 0x4, offset = 0x4, fixed_abs, tag = 'smem constant byte address 0x4 - core index']
  #allocation1 [shape = 'u32[72,128]{1,0:T(1,128)}', space=vmem, size = 0x9000, scoped, tag = 'internal scratch']
  #allocation2 [shape = 'f32[128,128]{1,0:T(8,128)}', space=vmem, size = 0x10000, scoped, tag = 'scratch operand']
  %s0 = inlined_call_operand.hbm [shape: f32[128,128], index: 0, kind: input, shape index: {}]
  %s1 = inlined_call_operand.hbm [shape: f32[128,128], index: 1, kind: input, shape index: {}]
  %s2 = inlined_call_operand.vmem [shape: f32[1,128], index: 2, kind: input, shape index: {}]
  %s3 = inlined_call_operand.hbm [shape: f32[128,128], index: 3, kind: output, shape index: {}]
  %s4 = sld [smem:[#allocation0]]
  $region42: #{tpu_custom_call.1} parent=0
    _
  %s6 = ssub.s32 1, %s4
  %s7 = scalar_select 0, %s6, %s4
  $region1: #{tpu_custom_call.1} parent=0
    #allocation3 [shape = 'u8[65536]{0}', space=vmem, size = 0x10000, scoped, tag = 'input window, operand 0, single buffered']
    #allocation4 [shape = 's32[1]{0}', space=sflag, size = 0x4, scoped, tag = 'scoped memory for tpu_custom_call.1']
    #allocation5 [shape = 's32[1]{0}', space=sflag, size = 0x4, scoped, tag = 'scoped memory for tpu_custom_call.1']
    #allocation6 [shape = 'u8[65536]{0}', space=vmem, size = 0x10000, scoped, tag = 'input window, operand 1, single buffered']
    #allocation7 [shape = 's32[1]{0}', space=sflag, size = 0x4, scoped, tag = 'scoped memory for tpu_custom_call.1']
    #allocation8 [shape = 'u8[65536]{0}', space=vmem, size = 0x10000, scoped, tag = 'output window, operand 0, single buffered']
    %8 = vsyncpa [#allocation4], 0
    %9 = vsyncpa [#allocation7], 0
    %10 = vsyncpa [#allocation5], 0
    // Predicated region
    $region2: #{tpu_custom_call.1} parent=1 // pred_check
      _
    $region3: #{tpu_custom_call.1} parent=1 // pred_check_branch
      %12 = sbr.rel (0) target = $region5
    $region4: #{tpu_custom_call.1} parent=1 // pred_region
      %14 = vsyncadd [#allocation4], 0
      %s15 = sshll.u32 %s0, 4
      %s16 = int_to_ptr.hbm [resolvable:$true] %s15
      %s17 = sshll.u32 [#allocation3], 4
      %s18 = int_to_ptr.vmem [resolvable:$true] %s17
      %23 = dma.hbm_to_vmem [thread:$0]  %s16, 2048, %s18, [#allocation4], 128, 128, 8
    $region5: #{tpu_custom_call.1} parent=1 // pred_fallthru
      _
    // Predicated region
    $region6: #{tpu_custom_call.1} parent=1 // pred_check
      _
    $region7: #{tpu_custom_call.1} parent=1 // pred_check_branch
      %25 = sbr.rel (0) target = $region9
    $region8: #{tpu_custom_call.1} parent=1 // pred_region
      %27 = vsyncadd [#allocation7], 0
      %s28 = sshll.u32 %s1, 4
      %s29 = int_to_ptr.hbm [resolvable:$true] %s28
      %s30 = sshll.u32 [#allocation6], 4
      %s31 = int_to_ptr.vmem [resolvable:$true] %s30
      %36 = dma.hbm_to_vmem [thread:$0]  %s29, 2048, %s31, [#allocation7], 128, 128, 8
    $region9: #{tpu_custom_call.1} parent=1 // pred_fallthru
      _
    // Predicated region
    $region10: #{tpu_custom_call.1} parent=1 // pred_check
      _
    $region11: #{tpu_custom_call.1} parent=1 // pred_check_branch
      %38 = sbr.rel (0) target = $region13
    $region12: #{tpu_custom_call.1} parent=1 // pred_region
      _
    $region13: #{tpu_custom_call.1} parent=1 // pred_fallthru
      _
    // Predicated region
    $region14: #{tpu_custom_call.1} parent=1 // pred_check
      _
    $region15: #{tpu_custom_call.1} parent=1 // pred_check_branch
      %40 = sbr.rel (0) target = $region17
    $region16: #{tpu_custom_call.1} parent=1 // pred_region
      %42 = dma.done [#allocation4], 2048
    $region17: #{tpu_custom_call.1} parent=1 // pred_fallthru
      _
    // Predicated region
    $region18: #{tpu_custom_call.1} parent=1 // pred_check
      _
    $region19: #{tpu_custom_call.1} parent=1 // pred_check_branch
      %44 = sbr.rel (0) target = $region21
    $region20: #{tpu_custom_call.1} parent=1 // pred_region
      %46 = dma.done [#allocation7], 2048
    $region21: #{tpu_custom_call.1} parent=1 // pred_fallthru
      _
    %v47 = vld [vmem:[#allocation3] sm:$0xff]
    %v48 = vld [vmem:[#allocation3 + $0x8] sm:$0xff]
    %v49 = vld [vmem:[#allocation3 + $0x10] sm:$0xff]
    %v50 = vld [vmem:[#allocation3 + $0x18] sm:$0xff]
    %v51 = vld [vmem:[#allocation3 + $0x20] sm:$0xff]
    %v52 = vld [vmem:[#allocation3 + $0x28] sm:$0xff]
    %v53 = vld [vmem:[#allocation3 + $0x30] sm:$0xff]
    %v54 = vld [vmem:[#allocation3 + $0x38] sm:$0xff]
    %v55 = vld [vmem:[#allocation3 + $0x40] sm:$0xff]
    %v56 = vld [vmem:[#allocation3 + $0x48] sm:$0xff]
    %v57 = vld [vmem:[#allocation3 + $0x50] sm:$0xff]
    %v58 = vld [vmem:[#allocation3 + $0x58] sm:$0xff]
    %v59 = vld [vmem:[#allocation3 + $0x60] sm:$0xff]
    %v60 = vld [vmem:[#allocation3 + $0x68] sm:$0xff]
    %v61 = vld [vmem:[#allocation3 + $0x70] sm:$0xff]
    %v62 = vld [vmem:[#allocation3 + $0x78] sm:$0xff]
    %v63 = vld [vmem:[#allocation6] sm:$0xff]
    %v64 = vld [vmem:[#allocation6 + $0x8] sm:$0xff]
    %v65 = vld [vmem:[#allocation6 + $0x10] sm:$0xff]
    %v66 = vld [vmem:[#allocation6 + $0x18] sm:$0xff]
    %v67 = vld [vmem:[#allocation6 + $0x20] sm:$0xff]
    %v68 = vld [vmem:[#allocation6 + $0x28] sm:$0xff]
    %v69 = vld [vmem:[#allocation6 + $0x30] sm:$0xff]
    %v70 = vld [vmem:[#allocation6 + $0x38] sm:$0xff]
    %v71 = vld [vmem:[#allocation6 + $0x40] sm:$0xff]
    %v72 = vld [vmem:[#allocation6 + $0x48] sm:$0xff]
    %v73 = vld [vmem:[#allocation6 + $0x50] sm:$0xff]
    %v74 = vld [vmem:[#allocation6 + $0x58] sm:$0xff]
    %v75 = vld [vmem:[#allocation6 + $0x60] sm:$0xff]
    %v76 = vld [vmem:[#allocation6 + $0x68] sm:$0xff]
    %v77 = vld [vmem:[#allocation6 + $0x70] sm:$0xff]
    %v78 = vld [vmem:[#allocation6 + $0x78] sm:$0xff]
    %79 = vmatpush.msra.mxu0 %v78
    %80 = vmatpush.msra.mxu0 %v77
    %81 = vmatpush.msra.mxu0 %v76
    %82 = vmatpush.msra.mxu0 %v75
    %83 = vmatpush.msra.mxu0 %v74
    %84 = vmatpush.msra.mxu0 %v73
    %85 = vmatpush.msra.mxu0 %v72
    %86 = vmatpush.msra.mxu0 %v71
    %87 = vmatpush.msra.mxu0 %v70
    %88 = vmatpush.msra.mxu0 %v69
    %89 = vmatpush.msra.mxu0 %v68
    %90 = vmatpush.msra.mxu0 %v67
    %91 = vmatpush.msra.mxu0 %v66
    %92 = vmatpush.msra.mxu0 %v65
    %93 = vmatpush.msra.mxu0 %v64
    %94 = vmatpush.msra.mxu0 %v63
    %95 = vmatmul.f32.gmra.mxu0 %v47
    %v96 = vpop.f32.mrf.mxu0
    %v97 = vadd.f32 0.0, %v96
    %98 = vmatmul.f32.gmra.mxu0 %v48
    %v99 = vpop.f32.mrf.mxu0
    %v100 = vadd.f32 0.0, %v99
    %101 = vmatmul.f32.gmra.mxu0 %v49
    %v102 = vpop.f32.mrf.mxu0
    %v103 = vadd.f32 0.0, %v102
    %104 = vmatmul.f32.gmra.mxu0 %v50
    %v105 = vpop.f32.mrf.mxu0
    %v106 = vadd.f32 0.0, %v105
    %107 = vmatmul.f32.gmra.mxu0 %v51
    %v108 = vpop.f32.mrf.mxu0
    %v109 = vadd.f32 0.0, %v108
    %110 = vmatmul.f32.gmra.mxu0 %v52
    %v111 = vpop.f32.mrf.mxu0
    %v112 = vadd.f32 0.0, %v111
    %113 = vmatmul.f32.gmra.mxu0 %v53
    %v114 = vpop.f32.mrf.mxu0
    %v115 = vadd.f32 0.0, %v114
    %116 = vmatmul.f32.gmra.mxu0 %v54
    %v117 = vpop.f32.mrf.mxu0
    %v118 = vadd.f32 0.0, %v117
    %119 = vmatmul.f32.gmra.mxu0 %v55
    %v120 = vpop.f32.mrf.mxu0
    %v121 = vadd.f32 0.0, %v120
    %122 = vmatmul.f32.gmra.mxu0 %v56
    %v123 = vpop.f32.mrf.mxu0
    %v124 = vadd.f32 0.0, %v123
    %125 = vmatmul.f32.gmra.mxu0 %v57
    %v126 = vpop.f32.mrf.mxu0
    %v127 = vadd.f32 0.0, %v126
    %128 = vmatmul.f32.gmra.mxu0 %v58
    %v129 = vpop.f32.mrf.mxu0
    %v130 = vadd.f32 0.0, %v129
    %131 = vmatmul.f32.gmra.mxu0 %v59
    %v132 = vpop.f32.mrf.mxu0
    %v133 = vadd.f32 0.0, %v132
    %134 = vmatmul.f32.gmra.mxu0 %v60
    %v135 = vpop.f32.mrf.mxu0
    %v136 = vadd.f32 0.0, %v135
    %137 = vmatmul.f32.gmra.mxu0 %v61
    %v138 = vpop.f32.mrf.mxu0
    %v139 = vadd.f32 0.0, %v138
    %140 = vmatmul.f32.gmra.mxu0 %v62
    %v141 = vpop.f32.mrf.mxu0
    %v142 = vadd.f32 0.0, %v141
    %143 = vdwg.mxu0
    %p144 = scmp.eq.s32.totalorder 0, 0
    // Predicated region
    $region22: #{tpu_custom_call.1} parent=1 // pred_check
      %p145 = pneg %p144
    $region23: #{tpu_custom_call.1} parent=1 // pred_check_branch
      %147 = sbr.rel (%p145) target = $region25
    $region24: #{tpu_custom_call.1} parent=1 // pred_region
      %148 = vst [vmem:[#allocation2] sm:$0xff] %v97
      %149 = vst [vmem:[#allocation2 + $0x8] sm:$0xff] %v100
      %150 = vst [vmem:[#allocation2 + $0x10] sm:$0xff] %v103
      %151 = vst [vmem:[#allocation2 + $0x18] sm:$0xff] %v106
      %152 = vst [vmem:[#allocation2 + $0x20] sm:$0xff] %v109
      %153 = vst [vmem:[#allocation2 + $0x28] sm:$0xff] %v112
      %154 = vst [vmem:[#allocation2 + $0x30] sm:$0xff] %v115
      %155 = vst [vmem:[#allocation2 + $0x38] sm:$0xff] %v118
      %156 = vst [vmem:[#allocation2 + $0x40] sm:$0xff] %v121
      %157 = vst [vmem:[#allocation2 + $0x48] sm:$0xff] %v124
      %158 = vst [vmem:[#allocation2 + $0x50] sm:$0xff] %v127
      %159 = vst [vmem:[#allocation2 + $0x58] sm:$0xff] %v130
      %160 = vst [vmem:[#allocation2 + $0x60] sm:$0xff] %v133
      %161 = vst [vmem:[#allocation2 + $0x68] sm:$0xff] %v136
      %162 = vst [vmem:[#allocation2 + $0x70] sm:$0xff] %v139
      %163 = vst [vmem:[#allocation2 + $0x78] sm:$0xff] %v142
    $region25: #{tpu_custom_call.1} parent=1 // pred_fallthru
      _
    %p164 = scmp.gt.s32.totalorder 0, 0
    // Predicated region
    $region26: #{tpu_custom_call.1} parent=1 // pred_check
      %p165 = pneg %p164
    $region27: #{tpu_custom_call.1} parent=1 // pred_check_branch
      %167 = sbr.rel (%p165) target = $region29
    $region28: #{tpu_custom_call.1} parent=1 // pred_region
      %v168 = vld [vmem:[#allocation2] sm:$0xff]
      %v169 = vld [vmem:[#allocation2 + $0x8] sm:$0xff]
      %v170 = vld [vmem:[#allocation2 + $0x10] sm:$0xff]
      %v171 = vld [vmem:[#allocation2 + $0x18] sm:$0xff]
      %v172 = vld [vmem:[#allocation2 + $0x20] sm:$0xff]
      %v173 = vld [vmem:[#allocation2 + $0x28] sm:$0xff]
      %v174 = vld [vmem:[#allocation2 + $0x30] sm:$0xff]
      %v175 = vld [vmem:[#allocation2 + $0x38] sm:$0xff]
      %v176 = vld [vmem:[#allocation2 + $0x40] sm:$0xff]
      %v177 = vld [vmem:[#allocation2 + $0x48] sm:$0xff]
      %v178 = vld [vmem:[#allocation2 + $0x50] sm:$0xff]
      %v179 = vld [vmem:[#allocation2 + $0x58] sm:$0xff]
      %v180 = vld [vmem:[#allocation2 + $0x60] sm:$0xff]
      %v181 = vld [vmem:[#allocation2 + $0x68] sm:$0xff]
      %v182 = vld [vmem:[#allocation2 + $0x70] sm:$0xff]
      %v183 = vld [vmem:[#allocation2 + $0x78] sm:$0xff]
      %v184 = vadd.f32 %v168, %v97
      %v185 = vadd.f32 %v169, %v100
      %v186 = vadd.f32 %v170, %v103
      %v187 = vadd.f32 %v171, %v106
      %v188 = vadd.f32 %v172, %v109
      %v189 = vadd.f32 %v173, %v112
      %v190 = vadd.f32 %v174, %v115
      %v191 = vadd.f32 %v175, %v118
      %v192 = vadd.f32 %v176, %v121
      %v193 = vadd.f32 %v177, %v124
      %v194 = vadd.f32 %v178, %v127
      %v195 = vadd.f32 %v179, %v130
      %v196 = vadd.f32 %v180, %v133
      %v197 = vadd.f32 %v181, %v136
      %v198 = vadd.f32 %v182, %v139
      %v199 = vadd.f32 %v183, %v142
      %200 = vst [vmem:[#allocation2] sm:$0xff] %v184
      %201 = vst [vmem:[#allocation2 + $0x8] sm:$0xff] %v185
      %202 = vst [vmem:[#allocation2 + $0x10] sm:$0xff] %v186
      %203 = vst [vmem:[#allocation2 + $0x18] sm:$0xff] %v187
      %204 = vst [vmem:[#allocation2 + $0x20] sm:$0xff] %v188
      %205 = vst [vmem:[#allocation2 + $0x28] sm:$0xff] %v189
      %206 = vst [vmem:[#allocation2 + $0x30] sm:$0xff] %v190
      %207 = vst [vmem:[#allocation2 + $0x38] sm:$0xff] %v191
      %208 = vst [vmem:[#allocation2 + $0x40] sm:$0xff] %v192
      %209 = vst [vmem:[#allocation2 + $0x48] sm:$0xff] %v193
      %210 = vst [vmem:[#allocation2 + $0x50] sm:$0xff] %v194
      %211 = vst [vmem:[#allocation2 + $0x58] sm:$0xff] %v195
      %212 = vst [vmem:[#allocation2 + $0x60] sm:$0xff] %v196
      %213 = vst [vmem:[#allocation2 + $0x68] sm:$0xff] %v197
      %214 = vst [vmem:[#allocation2 + $0x70] sm:$0xff] %v198
      %215 = vst [vmem:[#allocation2 + $0x78] sm:$0xff] %v199
    $region29: #{tpu_custom_call.1} parent=1 // pred_fallthru
      _
    // Predicated region
    $region30: #{tpu_custom_call.1} parent=1 // pred_check
      %p216 = pneg %p144
    $region31: #{tpu_custom_call.1} parent=1 // pred_check_branch
      %218 = sbr.rel (%p216) target = $region33
    $region32: #{tpu_custom_call.1} parent=1 // pred_region
      %v219 = vld [vmem:[#allocation2] sm:$0xff]
      %v220 = vld [vmem:[#allocation2 + $0x8] sm:$0xff]
      %v221 = vld [vmem:[#allocation2 + $0x10] sm:$0xff]
      %v222 = vld [vmem:[#allocation2 + $0x18] sm:$0xff]
      %v223 = vld [vmem:[#allocation2 + $0x20] sm:$0xff]
      %v224 = vld [vmem:[#allocation2 + $0x28] sm:$0xff]
      %v225 = vld [vmem:[#allocation2 + $0x30] sm:$0xff]
      %v226 = vld [vmem:[#allocation2 + $0x38] sm:$0xff]
      %v227 = vld [vmem:[#allocation2 + $0x40] sm:$0xff]
      %v228 = vld [vmem:[#allocation2 + $0x48] sm:$0xff]
      %v229 = vld [vmem:[#allocation2 + $0x50] sm:$0xff]
      %v230 = vld [vmem:[#allocation2 + $0x58] sm:$0xff]
      %v231 = vld [vmem:[#allocation2 + $0x60] sm:$0xff]
      %v232 = vld [vmem:[#allocation2 + $0x68] sm:$0xff]
      %v233 = vld [vmem:[#allocation2 + $0x70] sm:$0xff]
      %v234 = vld [vmem:[#allocation2 + $0x78] sm:$0xff]
      %v235 = vld [vmem:[%s2] sm:$0x1]
      %v237 = vperm.slane %v235, 0
      %v239 = vadd.f32 %v219, %v237
      %v240 = vadd.f32 %v220, %v237
      %v241 = vadd.f32 %v221, %v237
      %v242 = vadd.f32 %v222, %v237
      %v243 = vadd.f32 %v223, %v237
      %v244 = vadd.f32 %v224, %v237
      %v245 = vadd.f32 %v225, %v237
      %v246 = vadd.f32 %v226, %v237
      %v247 = vadd.f32 %v227, %v237
      %v248 = vadd.f32 %v228, %v237
      %v249 = vadd.f32 %v229, %v237
      %v250 = vadd.f32 %v230, %v237
      %v251 = vadd.f32 %v231, %v237
      %v252 = vadd.f32 %v232, %v237
      %v253 = vadd.f32 %v233, %v237
      %v254 = vadd.f32 %v234, %v237
      %255 = vst [vmem:[#allocation8] sm:$0xff] %v239
      %256 = vst [vmem:[#allocation8 + $0x8] sm:$0xff] %v240
      %257 = vst [vmem:[#allocation8 + $0x10] sm:$0xff] %v241
      %258 = vst [vmem:[#allocation8 + $0x18] sm:$0xff] %v242
      %259 = vst [vmem:[#allocation8 + $0x20] sm:$0xff] %v243
      %260 = vst [vmem:[#allocation8 + $0x28] sm:$0xff] %v244
      %261 = vst [vmem:[#allocation8 + $0x30] sm:$0xff] %v245
      %262 = vst [vmem:[#allocation8 + $0x38] sm:$0xff] %v246
      %263 = vst [vmem:[#allocation8 + $0x40] sm:$0xff] %v247
      %264 = vst [vmem:[#allocation8 + $0x48] sm:$0xff] %v248
      %265 = vst [vmem:[#allocation8 + $0x50] sm:$0xff] %v249
      %266 = vst [vmem:[#allocation8 + $0x58] sm:$0xff] %v250
      %267 = vst [vmem:[#allocation8 + $0x60] sm:$0xff] %v251
      %268 = vst [vmem:[#allocation8 + $0x68] sm:$0xff] %v252
      %269 = vst [vmem:[#allocation8 + $0x70] sm:$0xff] %v253
      %270 = vst [vmem:[#allocation8 + $0x78] sm:$0xff] %v254
    $region33: #{tpu_custom_call.1} parent=1 // pred_fallthru
      _
    // Predicated region
    $region34: #{tpu_custom_call.1} parent=1 // pred_check
      _
    $region35: #{tpu_custom_call.1} parent=1 // pred_check_branch
      %272 = sbr.rel (0) target = $region37
    $region36: #{tpu_custom_call.1} parent=1 // pred_region
      %274 = vsyncadd [#allocation5], 0
      %s275 = sshll.u32 [#allocation8], 4
      %s276 = int_to_ptr.vmem [resolvable:$true] %s275
      %s277 = sshll.u32 %s3, 4
      %s278 = int_to_ptr.hbm [resolvable:$true] %s277
      %283 = dma.vmem_to_hbm [thread:$0]  %s276, 2048, %s278, [#allocation5], 128, 128, 8
    $region37: #{tpu_custom_call.1} parent=1 // pred_fallthru
      _
    // Predicated region
    $region38: #{tpu_custom_call.1} parent=1 // pred_check
      _
    $region39: #{tpu_custom_call.1} parent=1 // pred_check_branch
      %285 = sbr.rel (0) target = $region41
    $region40: #{tpu_custom_call.1} parent=1 // pred_region
      %287 = dma.done [#allocation5], 2048
    $region41: #{tpu_custom_call.1} parent=1 // pred_fallthru
      _
    %288 = vsyncpa [#allocation4], 1
    %289 = vsyncpa [#allocation7], 1
    %290 = vsyncpa [#allocation5], 1

</llo_original>
